<compile_context>
chip_gen: v6e
topology: v6e:2x2x1
jax: 0.10.0
libtpu: 0.0.40
codegen_flags: <defaults>
</compile_context>

<pallas_src>
import functools

import numpy as np
import jax
import jax.numpy as jnp
from jax.experimental import pallas as pl
from jax.experimental.pallas import tpu as pltpu

# ---- module config (matches LogMelFilterBanks defaults) ----
N_FFT = 400
HOP = 160
N_MELS = 80
SAMPLERATE = 16000
N_FREQS = N_FFT // 2 + 1          # 201 (onesided=True)
N_FREQS_PAD = 256                 # lane-aligned padding of the freq axis
N_MELS_PAD = 128                  # lane-aligned padding of the mel axis
K_PAD = 3 * HOP                   # 480: DFT K-dim padded to 3 full hop chunks
LOG_EPS = 1e-6
TM_MAX = 1024                     # max frames (rows) per grid step


def _round_up(x, m):
    return ((x + m - 1) // m) * m


# ---------------- parameter construction (deterministic, cached) ----------------
def _hann_window(n):
    # torch.hann_window default (periodic=True): 0.5 - 0.5*cos(2*pi*i/n)
    i = np.arange(n, dtype=np.float64)
    return 0.5 - 0.5 * np.cos(2.0 * np.pi * i / n)


def _hz_to_mel_htk(f):
    return 2595.0 * np.log10(1.0 + f / 700.0)


def _mel_to_hz_htk(m):
    return 700.0 * (10.0 ** (m / 2595.0) - 1.0)


def _melscale_fbanks(n_freqs, f_min, f_max, n_mels, sample_rate):
    # Mirrors torchaudio.functional.melscale_fbanks (mel_scale='htk', norm=None).
    all_freqs = np.linspace(0.0, sample_rate // 2, n_freqs)
    m_pts = np.linspace(_hz_to_mel_htk(f_min), _hz_to_mel_htk(f_max), n_mels + 2)
    f_pts = _mel_to_hz_htk(m_pts)
    f_diff = f_pts[1:] - f_pts[:-1]                       # (n_mels+1,)
    slopes = f_pts[None, :] - all_freqs[:, None]          # (n_freqs, n_mels+2)
    down = -slopes[:, :-2] / f_diff[:-1]
    up = slopes[:, 2:] / f_diff[1:]
    return np.maximum(0.0, np.minimum(down, up))          # (n_freqs, n_mels)


@functools.lru_cache(maxsize=1)
def _build_constants():
    """Window-fused one-sided real DFT weights + padded mel filterbank (bf16)."""
    n = np.arange(N_FFT, dtype=np.float64)[:, None]
    k = np.arange(N_FREQS, dtype=np.float64)[None, :]
    ang = 2.0 * np.pi * n * k / N_FFT
    win = _hann_window(N_FFT)[:, None]
    # (480, 512): rows 0:400 are [win*cos | -win*sin], rows 400:480 are zero so the
    # kernel's third hop chunk can use a uniform 160-wide LHS.
    dftw = np.zeros((K_PAD, 2 * N_FREQS_PAD), dtype=np.float32)
    dftw[:N_FFT, :N_FREQS] = np.cos(ang) * win
    dftw[:N_FFT, N_FREQS_PAD:N_FREQS_PAD + N_FREQS] = -np.sin(ang) * win
    mel = np.zeros((N_FREQS_PAD, N_MELS_PAD), dtype=np.float32)
    mel[:N_FREQS, :N_MELS] = _melscale_fbanks(
        N_FREQS, 0.0, float(SAMPLERATE // 2), N_MELS, SAMPLERATE)
    return (jnp.asarray(dftw, dtype=jnp.bfloat16),
            jnp.asarray(mel, dtype=jnp.bfloat16))


# ---------------- Pallas kernel ----------------
def logmel_kernel(a_ref, e_ref, dftw_ref, mel_ref, out_ref):
    # a_ref:    (TM, 160) bf16   hop rows [t*TM, t*TM+TM)
    # e_ref:    (8, 160)  bf16   hop rows [t*TM+TM, t*TM+TM+8)  (lookahead for +1/+2 shifts)
    # dftw_ref: (480, 512) bf16  window-fused [cos | sin] DFT weights, K padded to 480
    # mel_ref:  (256, 128) bf16  zero-padded mel filterbank
    # out_ref:  (TM, 128) f32    lane-dense output block
    a = a_ref[...]
    e = e_ref[...]
    tm = a.shape[0]
    full = jnp.concatenate([a, e], axis=0)                 # (TM+8, 160)

    # Framed DFT = three accumulated matmuls over row-shifted hop views.
    spec = jnp.dot(a, dftw_ref[0:HOP, :],
                   preferred_element_type=jnp.float32)     # (TM, 512)
    spec = spec + jnp.dot(full[1:1 + tm], dftw_ref[HOP:2 * HOP, :],
                          preferred_element_type=jnp.float32)
    spec = spec + jnp.dot(full[2:2 + tm], dftw_ref[2 * HOP:3 * HOP, :],
                          preferred_element_type=jnp.float32)

    re = spec[:, :N_FREQS_PAD]                             # vreg-aligned slices
    im = spec[:, N_FREQS_PAD:]
    power = re * re + im * im                              # |STFT|^2 (power=2.0), f32

    mel = jnp.dot(power.astype(jnp.bfloat16), mel_ref[...],
                  preferred_element_type=jnp.float32)      # (TM, 128)
    out_ref[...] = jnp.log(mel + LOG_EPS)


def _const_spec(shape):
    """Constant-operand BlockSpec; single-buffered when the jax version supports it."""
    idx = lambda b, t: (0, 0)
    try:
        return pl.BlockSpec(shape, idx, pipeline_mode=pl.Buffered(1))
    except Exception:
        return pl.BlockSpec(shape, idx)


@jax.jit
def log_mel_filterbanks(x):
    """x: (batch, time) float32 audio -> (batch, n_mels, n_frames) float32."""
    x = x.astype(jnp.float32)
    B, T = x.shape

    # --- glue: center + reflect padding (torch.stft center=True, pad_mode='reflect')
    pad = N_FFT // 2
    xp = jnp.pad(x, ((0, 0), (pad, pad)), mode="reflect")
    Tp = T + 2 * pad
    n_frames = 1 + (Tp - N_FFT) // HOP

    # --- tile size: big tiles, but guarantee >=2 grid steps when B == 1 (v7x megacore)
    if B >= 2:
        tm = min(TM_MAX, _round_up(n_frames, 8))
    else:
        tm = min(TM_MAX, _round_up(pl.cdiv(n_frames, 2), 8))
    tm = max(tm, 8)
    tiles = pl.cdiv(n_frames, tm)          # frame tiles per batch element
    f_pad = tiles * tm                     # padded frame count per batch element
    h_pad = f_pad + 8                      # hop rows per batch (+8 for the lookahead block)

    # --- hop-shaped audio (no 2.5x frames array): (B, h_pad, 160), bf16 in HBM
    need = h_pad * HOP
    xp = jnp.pad(xp, ((0, 0), (0, need - Tp))) if need > Tp else xp[:, :need]
    hops = xp.reshape(B, h_pad, HOP).astype(jnp.bfloat16)

    dftw, mel_fb = _build_constants()

    out = pl.pallas_call(
        logmel_kernel,
        out_shape=jax.ShapeDtypeStruct((B, f_pad, N_MELS_PAD), jnp.float32),
        grid_spec=pltpu.PrefetchScalarGridSpec(
            num_scalar_prefetch=0,
            grid=(B, tiles),
            in_specs=[
                # main hop tile: rows [t*tm, t*tm + tm)
                pl.BlockSpec((None, tm, HOP), lambda b, t: (b, t, 0)),
                # lookahead tile: rows [(t+1)*tm, (t+1)*tm + 8) of the SAME hops array
                pl.BlockSpec((None, 8, HOP), lambda b, t: (b, (t + 1) * (tm // 8), 0)),
                _const_spec((K_PAD, 2 * N_FREQS_PAD)),
                _const_spec((N_FREQS_PAD, N_MELS_PAD)),
            ],
            out_specs=pl.BlockSpec((None, tm, N_MELS_PAD), lambda b, t: (b, t, 0)),
        ),
        compiler_params=pltpu.CompilerParams(
            dimension_semantics=("parallel", "parallel"),
            vmem_limit_bytes=32 * 1024 * 1024,
        ),
    )(hops, hops, dftw, mel_fb)

    # --- glue: drop padding, return PyTorch convention (batch, n_mels, n_frames)
    out = out[:, :n_frames, :N_MELS]
    return jnp.transpose(out, (0, 2, 1))


if __name__ == "__main__":
    key = jax.random.PRNGKey(0)
    batch, time = 2, 1600                       # -> n_frames = 1 + 1600 // 160 = 11
    x = jax.random.normal(key, (batch, time), dtype=jnp.float32)

    y = log_mel_filterbanks(x)
    jax.block_until_ready(y)

    assert y.shape == (batch, N_MELS, 1 + time // HOP), y.shape
    assert y.dtype == jnp.float32
    assert bool(jnp.all(jnp.isfinite(y)))
    print("KERNEL_OK")
</pallas_src>

<mosaic_0001>
module attributes {stable_mosaic.version = 11 : i64} {
  func.func @logmel_kernel(%arg0: i32, %arg1: i32, %arg2: memref<1x16x160xbf16, #tpu.memory_space<vmem>>, %arg3: memref<1x8x160xbf16, #tpu.memory_space<vmem>>, %arg4: memref<480x512xbf16, #tpu.memory_space<vmem>>, %arg5: memref<256x128xbf16, #tpu.memory_space<vmem>>, %arg6: memref<1x16x128xf32, #tpu.memory_space<vmem>>) attributes {dimension_semantics = [#tpu.dimension_semantics<parallel>, #tpu.dimension_semantics<parallel>], iteration_bounds = array<i64: 2, 1>, scalar_prefetch = 0 : i64, scratch_operands = 0 : i64, tpu.core_type = #tpu.core_type<tc>, window_params = [{transform_indices = @transform_0, window_bounds = array<i64: 1, 16, 160>}, {transform_indices = @transform_1, window_bounds = array<i64: 1, 8, 160>}, {pipeline_mode = #tpu.pipeline_mode<synchronous>, transform_indices = @transform_2, window_bounds = array<i64: 480, 512>}, {pipeline_mode = #tpu.pipeline_mode<synchronous>, transform_indices = @transform_3, window_bounds = array<i64: 256, 128>}, {transform_indices = @transform_4, window_bounds = array<i64: 1, 16, 128>}]} {
    %c0 = arith.constant 0 : index
    %c0_0 = arith.constant 0 : index
    %c0_1 = arith.constant 0 : index
    %0 = vector.load %arg2[%c0, %c0_0, %c0_1] : memref<1x16x160xbf16, #tpu.memory_space<vmem>>, vector<1x16x160xbf16>
    %1 = vector.shape_cast %0 : vector<1x16x160xbf16> to vector<16x160xbf16>
    %c0_2 = arith.constant 0 : index
    %c0_3 = arith.constant 0 : index
    %c0_4 = arith.constant 0 : index
    %2 = vector.load %arg3[%c0_2, %c0_3, %c0_4] : memref<1x8x160xbf16, #tpu.memory_space<vmem>>, vector<1x8x160xbf16>
    %3 = vector.shape_cast %2 : vector<1x8x160xbf16> to vector<8x160xbf16>
    %4 = tpu.concatenate %1, %3 in 0 : vector<16x160xbf16>, vector<8x160xbf16> -> vector<24x160xbf16>
    %c0_5 = arith.constant 0 : index
    %c0_6 = arith.constant 0 : index
    %5 = vector.load %arg4[%c0_5, %c0_6] : memref<480x512xbf16, #tpu.memory_space<vmem>>, vector<160x512xbf16>
    %cst = arith.constant dense<0.000000e+00> : vector<16x512xf32>
    %6 = tpu.matmul %1, %5, %cst {dimension_numbers = #tpu.dot_dimension_numbers<[1], [0], [0], [1], [0, 0, 1, 1], [], []>} : vector<16x160xbf16>, vector<160x512xbf16>, vector<16x512xf32> -> vector<16x512xf32>
    %7 = vector.extract_strided_slice %4 {offsets = [1, 0], sizes = [16, 160], strides = [1, 1]} : vector<24x160xbf16> to vector<16x160xbf16>
    %c160 = arith.constant 160 : index
    %c0_7 = arith.constant 0 : index
    %8 = vector.load %arg4[%c160, %c0_7] : memref<480x512xbf16, #tpu.memory_space<vmem>>, vector<160x512xbf16>
    %cst_8 = arith.constant dense<0.000000e+00> : vector<16x512xf32>
    %9 = tpu.matmul %7, %8, %cst_8 {dimension_numbers = #tpu.dot_dimension_numbers<[1], [0], [0], [1], [0, 0, 1, 1], [], []>} : vector<16x160xbf16>, vector<160x512xbf16>, vector<16x512xf32> -> vector<16x512xf32>
    %10 = arith.addf %6, %9 : vector<16x512xf32>
    %11 = vector.extract_strided_slice %4 {offsets = [2, 0], sizes = [16, 160], strides = [1, 1]} : vector<24x160xbf16> to vector<16x160xbf16>
    %c320 = arith.constant 320 : index
    %c0_9 = arith.constant 0 : index
    %12 = vector.load %arg4[%c320, %c0_9] : memref<480x512xbf16, #tpu.memory_space<vmem>>, vector<160x512xbf16>
    %cst_10 = arith.constant dense<0.000000e+00> : vector<16x512xf32>
    %13 = tpu.matmul %11, %12, %cst_10 {dimension_numbers = #tpu.dot_dimension_numbers<[1], [0], [0], [1], [0, 0, 1, 1], [], []>} : vector<16x160xbf16>, vector<160x512xbf16>, vector<16x512xf32> -> vector<16x512xf32>
    %14 = arith.addf %10, %13 : vector<16x512xf32>
    %15 = vector.extract_strided_slice %14 {offsets = [0, 0], sizes = [16, 256], strides = [1, 1]} : vector<16x512xf32> to vector<16x256xf32>
    %16 = vector.extract_strided_slice %14 {offsets = [0, 256], sizes = [16, 256], strides = [1, 1]} : vector<16x512xf32> to vector<16x256xf32>
    %17 = arith.mulf %15, %15 : vector<16x256xf32>
    %18 = arith.mulf %16, %16 : vector<16x256xf32>
    %19 = arith.addf %17, %18 : vector<16x256xf32>
    %20 = arith.truncf %19 : vector<16x256xf32> to vector<16x256xbf16>
    %c0_11 = arith.constant 0 : index
    %c0_12 = arith.constant 0 : index
    %21 = vector.load %arg5[%c0_11, %c0_12] : memref<256x128xbf16, #tpu.memory_space<vmem>>, vector<256x128xbf16>
    %cst_13 = arith.constant dense<0.000000e+00> : vector<16x128xf32>
    %22 = tpu.matmul %20, %21, %cst_13 {dimension_numbers = #tpu.dot_dimension_numbers<[1], [0], [0], [1], [0, 0, 1, 1], [], []>} : vector<16x256xbf16>, vector<256x128xbf16>, vector<16x128xf32> -> vector<16x128xf32>
    %cst_14 = arith.constant 9.99999997E-7 : f32
    %23 = vector.broadcast %cst_14 : f32 to vector<16x128xf32>
    %24 = arith.addf %22, %23 : vector<16x128xf32>
    %25 = math.log %24 : vector<16x128xf32>
    %c0_15 = arith.constant 0 : index
    %c0_16 = arith.constant 0 : index
    %c0_17 = arith.constant 0 : index
    %26 = vector.load %arg6[%c0_15, %c0_16, %c0_17] : memref<1x16x128xf32, #tpu.memory_space<vmem>>, vector<1x16x128xf32>
    %27 = vector.shape_cast %26 : vector<1x16x128xf32> to vector<16x128xf32>
    %28 = vector.shape_cast %25 : vector<16x128xf32> to vector<1x16x128xf32>
    tpu.vector_store %arg6[%c0_15, %c0_16, %c0_17], %28 {strides = array<i32>} : memref<1x16x128xf32, #tpu.memory_space<vmem>>, vector<1x16x128xf32>,
    return
  }
  func.func @transform_0(%arg0: i32, %arg1: i32) -> (i32, i32, i32) {
    %c0_i32 = arith.constant 0 : i32
    %c0_i32_0 = arith.constant 0 : i32
    return %arg0, %arg1, %c0_i32 : i32, i32, i32
  }
  func.func @transform_1(%arg0: i32, %arg1: i32) -> (i32, i32, i32) {
    %c1_i32 = arith.constant 1 : i32
    %0 = arith.addi %arg1, %c1_i32 : i32
    %c2_i32 = arith.constant 2 : i32
    %1 = arith.muli %0, %c2_i32 : i32
    %c0_i32 = arith.constant 0 : i32
    %c0_i32_0 = arith.constant 0 : i32
    return %arg0, %1, %c0_i32 : i32, i32, i32
  }
  func.func @transform_2(%arg0: i32, %arg1: i32) -> (i32, i32) {
    %c0_i32 = arith.constant 0 : i32
    %c0_i32_0 = arith.constant 0 : i32
    %c0_i32_1 = arith.constant 0 : i32
    return %c0_i32, %c0_i32_0 : i32, i32
  }
  func.func @transform_3(%arg0: i32, %arg1: i32) -> (i32, i32) {
    %c0_i32 = arith.constant 0 : i32
    %c0_i32_0 = arith.constant 0 : i32
    %c0_i32_1 = arith.constant 0 : i32
    return %c0_i32, %c0_i32_0 : i32, i32
  }
  func.func @transform_4(%arg0: i32, %arg1: i32) -> (i32, i32, i32) {
    %c0_i32 = arith.constant 0 : i32
    %c0_i32_0 = arith.constant 0 : i32
    return %arg0, %arg1, %c0_i32 : i32, i32, i32
  }
}

</mosaic_0001>

<llo_original>
// kernel: reverse.1
$region0: #{reverse.1}
  %s0 = inlined_call_operand.vmem [shape: bf16[2,256], index: 0, kind: input, shape index: {}]
  %s1 = inlined_call_operand.vmem [shape: bf16[2,256], index: 1, kind: output, shape index: {}]
  %v2 = vlaneseq
  %v3 = vsub.s32 127, %v2
  %4 = vset.pattern.permute.xlu0 %v3
  $region1: #{reverse.1} parent=0
    #allocation0 [shape = 'u8[4096]{0}', space=vmem, size = 0x1000, scoped, tag = 'operand span for operand 0']
    #allocation1 [shape = 'u8[1024]{0}', space=vmem, size = 0x400, scoped, tag = 'packed  for operand 0']
    #allocation2 [shape = 'u8[4096]{0}', space=vmem, size = 0x1000, scoped, tag = 'operand span for operand 1']
    #allocation3 [shape = 'u8[1024]{0}', space=vmem, size = 0x400, scoped, tag = 'packed  for operand 1']
    loop: start=0, step=1, limit=4
    $region2: #{reverse.1} parent=1 // loop_pre_header
      _
    $region3: #{reverse.1} parent=1 // loop_header
      %s6 = sphi 0, %s10
      %p7 = scmp.ge.s32.totalorder %s6, 4
      %s13 = sphi 0, %s25
      %s14 = sphi 0, %s21
      %s15 = sphi 0, %s13
      %s16 = sphi 0, %s14
      %s17 = sphi 0, %s15
      %s18 = sphi 0, %s16
    $region4: #{reverse.1} parent=1 // loop_header_branch
      %9 = sbr.rel (%p7) target = $region8
    $region5: #{reverse.1} parent=1 // loop_body
      %s11 = ssub.s32 %s6, 1
      %s12 = ssub.s32 %s6, 2
      %s19 = sadd.s32 1, %s14
      %p20 = scmp.ge.s32.totalorder %s19, 2
      %s21 = scalar_select %p20, 0, %s19
      %s22 = sadd.s32 1, %s13
      %s23 = scalar_select %p20, %s22, %s13
      %p24 = scmp.ge.s32.totalorder %s23, 1
      %s25 = scalar_select %p24, 0, %s23
      %p26 = scmp.le.s32.totalorder 1, %s6
      %p27 = scmp.lt.s32.totalorder %s6, 3
      %p28 = pnand %p26, %p27
      %p29 = pneg %p28
      // Predicated region
      $region9: #{reverse.1} parent=5 // pred_check
        _
      $region10: #{reverse.1} parent=5 // pred_check_branch
        %31 = sbr.rel (%p28) target = $region12
      $region11: #{reverse.1} parent=5 // pred_region
        %s32 = ssub.s32 %s6, 1
      $region12: #{reverse.1} parent=5 // pred_fallthru
        _
      %p33 = scmp.lt.s32.totalorder %s6, 2
      // Predicated region
      $region13: #{reverse.1} parent=5 // pred_check
        %p34 = pneg %p33
      $region14: #{reverse.1} parent=5 // pred_check_branch
        %36 = sbr.rel (%p34) target = $region16
      $region15: #{reverse.1} parent=5 // pred_region
        %s37 = sand.u32 %s6, 1
        %s38 = sand.u32 %s6, 1
        %s39 = scalar_lea.vmem [#allocation1], %s38
        %s40 = ssub.s32 1, %s14
        %s41 = smul.addr %s13, 2
        %s42 = sadd.s32 %s40, %s41
        %s43 = scalar_lea.vmem %s0, %s42
        // Predicated region
        $region17: #{reverse.1} parent=15 // pred_check
          _
        $region18: #{reverse.1} parent=15 // pred_check_branch
          %45 = sbr.rel (0) target = $region20
        $region19: #{reverse.1} parent=15 // pred_region
          // Predicated region
          $region21: #{reverse.1} parent=19 // pred_check
            _
          $region22: #{reverse.1} parent=19 // pred_check_branch
            %47 = sbr.rel target = $region24
          $region23: #{reverse.1} parent=19 // pred_region
            // Predicated region
            $region36: #{reverse.1} parent=23 // pred_check
              _
            $region37: #{reverse.1} parent=23 // pred_check_branch
              %63 = sbr.rel (0) target = $region39
            $region38: #{reverse.1} parent=23 // pred_region
              %s65 = ssub.s32 2, 1
              loop: start=0, step=1, limit=1
              $region40: #{reverse.1} parent=38 // loop_pre_header
                _
              $region41: #{reverse.1} parent=38 // loop_header
                %s67 = sphi 0, %s71
                %p68 = scmp.ge.s32.totalorder %s67, 1
                %s72 = sphi %s43, %s43
                %s73 = sphi %s39, %s39
              $region42: #{reverse.1} parent=38 // loop_header_branch
                %70 = sbr.rel (%p68) target = $region46
              $region43: #{reverse.1} parent=38 // loop_body
                %v74 = vld [vmem:[%s72] sm:%s65]
                %75 = vst [vmem:[%s73] sm:%s65] %v74
              $region44: #{reverse.1} parent=38 // loop_footer
                %s71 = sadd.s32 1, %s67
              $region45: #{reverse.1} parent=38 // loop_footer_branch
                %66 = sbr.rel target = $region41
              $region46: #{reverse.1} parent=38 // loop_exit
                _
            $region39: #{reverse.1} parent=23 // pred_fallthru
              _
          $region24: #{reverse.1} parent=19 // pred_fallthru
            _
          // Predicated region
          $region25: #{reverse.1} parent=19 // pred_check
            _
          $region26: #{reverse.1} parent=19 // pred_check_branch
            %49 = sbr.rel (0) target = $region28
          $region27: #{reverse.1} parent=19 // pred_region
            %s51 = ssub.s32 2, 1
            loop: start=0, step=1, limit=1
            $region29: #{reverse.1} parent=27 // loop_pre_header
              _
            $region30: #{reverse.1} parent=27 // loop_header
              %s53 = sphi 0, %s57
              %p54 = scmp.ge.s32.totalorder %s53, 1
              %s58 = sphi %s43, %s43
              %s59 = sphi %s39, %s39
            $region31: #{reverse.1} parent=27 // loop_header_branch
              %56 = sbr.rel (%p54) target = $region35
            $region32: #{reverse.1} parent=27 // loop_body
              %v60 = vld [vmem:[%s58] sm:%s51]
              %61 = vst [vmem:[%s59] sm:%s51] %v60
            $region33: #{reverse.1} parent=27 // loop_footer
              %s57 = sadd.s32 1, %s53
            $region34: #{reverse.1} parent=27 // loop_footer_branch
              %52 = sbr.rel target = $region30
            $region35: #{reverse.1} parent=27 // loop_exit
              _
          $region28: #{reverse.1} parent=19 // pred_fallthru
            _
        $region20: #{reverse.1} parent=15 // pred_fallthru
          _
        %76 = vnop
      $region16: #{reverse.1} parent=5 // pred_fallthru
        _
      %p77 = scmp.le.s32.totalorder 1, %s6
      %p78 = scmp.lt.s32.totalorder %s6, 3
      %p79 = pnand %p77, %p78
      %p80 = pneg %p79
      // Predicated region
      $region47: #{reverse.1} parent=5 // pred_check
        _
      $region48: #{reverse.1} parent=5 // pred_check_branch
        %82 = sbr.rel (%p79) target = $region50
      $region49: #{reverse.1} parent=5 // pred_region
        %s83 = ssub.s32 %s6, 1
        %s84 = sand.u32 %s11, 1
        %s85 = sand.u32 %s11, 1
        %s86 = scalar_lea.vmem [#allocation1], %s85
        %s87 = sand.u32 %s11, 1
        %s88 = sand.u32 %s11, 1
        %s89 = scalar_lea.vmem [#allocation1], %s88
        %s90 = sand.u32 %s11, 1
        %s91 = sand.u32 %s11, 1
        %s92 = scalar_lea.vmem [#allocation3], %s91
        %s94 = smul.u32 1, 2
        %s95 = sshll.u32 1, %s94
        %s96 = ssub.s32 %s95, 1
        %s97 = sshrl.u32 %s96, 1
        %s98 = sor.u32 %s96, %s97
        %s99 = sand.u32 %s98, 85
        %s100 = sshrl.u32 %s99, 1
        %s101 = sor.u32 %s99, %s100
        %s102 = sand.u32 51, %s101
        %s103 = sshrl.u32 %s102, 2
        %s104 = sor.u32 %s102, %s103
        %s105 = sand.u32 15, %s104
        %v106 = vld [vmem:[%s89] sm:%s105]
        %v107 = vunpack.c.l.bf16 %v106
        %v108 = vunpack.c.h.bf16 %v106
        %109 = vst [vmem:[#allocation0] sm:%s96] %v107
        %s110 = ssub.s32 1, %s16
        %v111 = vld [vmem:[#allocation0] sm:$0xff]
        %112 = vperm.xlu0 %4, %v111
        %v113 = vpop.permute.xlu0 %112
        %114 = vst [vmem:[#allocation2] sm:$0xff] %v113
        %s116 = smul.u32 1, 2
        %s117 = sshll.u32 1, %s116
        %s118 = ssub.s32 %s117, 1
        %s119 = sshrl.u32 %s116, 1
        %v120 = vld [vmem:[#allocation2] sm:%s118]
        %v121 = vpack.c.bf16 0.0, %v120
        %s122 = sshll.u32 1, %s119
        %s123 = ssub.s32 %s122, 1
        %124 = vst [vmem:[%s92] sm:%s123] %v121
        %s125 = sand.u32 %s11, 1
        %s126 = sand.u32 %s11, 1
        %s127 = scalar_lea.vmem [#allocation3], %s126
        %s128 = smul.addr %s15, 2
        %s129 = sadd.s32 %s16, %s128
        %s130 = scalar_lea.vmem %s1, %s129
        // Predicated region
        $region51: #{reverse.1} parent=49 // pred_check
          _
        $region52: #{reverse.1} parent=49 // pred_check_branch
          %132 = sbr.rel (0) target = $region54
        $region53: #{reverse.1} parent=49 // pred_region
          // Predicated region
          $region55: #{reverse.1} parent=53 // pred_check
            _
          $region56: #{reverse.1} parent=53 // pred_check_branch
            %134 = sbr.rel target = $region58
          $region57: #{reverse.1} parent=53 // pred_region
            // Predicated region
            $region70: #{reverse.1} parent=57 // pred_check
              _
            $region71: #{reverse.1} parent=57 // pred_check_branch
              %150 = sbr.rel (0) target = $region73
            $region72: #{reverse.1} parent=57 // pred_region
              %s152 = ssub.s32 2, 1
              loop: start=0, step=1, limit=1
              $region74: #{reverse.1} parent=72 // loop_pre_header
                _
              $region75: #{reverse.1} parent=72 // loop_header
                %s154 = sphi 0, %s158
                %p155 = scmp.ge.s32.totalorder %s154, 1
                %s159 = sphi %s127, %s127
                %s160 = sphi %s130, %s130
              $region76: #{reverse.1} parent=72 // loop_header_branch
                %157 = sbr.rel (%p155) target = $region80
              $region77: #{reverse.1} parent=72 // loop_body
                %v161 = vld [vmem:[%s159] sm:%s152]
                %162 = vst [vmem:[%s160] sm:%s152] %v161
              $region78: #{reverse.1} parent=72 // loop_footer
                %s158 = sadd.s32 1, %s154
              $region79: #{reverse.1} parent=72 // loop_footer_branch
                %153 = sbr.rel target = $region75
              $region80: #{reverse.1} parent=72 // loop_exit
                _
            $region73: #{reverse.1} parent=57 // pred_fallthru
              _
          $region58: #{reverse.1} parent=53 // pred_fallthru
            _
          // Predicated region
          $region59: #{reverse.1} parent=53 // pred_check
            _
          $region60: #{reverse.1} parent=53 // pred_check_branch
            %136 = sbr.rel (0) target = $region62
          $region61: #{reverse.1} parent=53 // pred_region
            %s138 = ssub.s32 2, 1
            loop: start=0, step=1, limit=1
            $region63: #{reverse.1} parent=61 // loop_pre_header
              _
            $region64: #{reverse.1} parent=61 // loop_header
              %s140 = sphi 0, %s144
              %p141 = scmp.ge.s32.totalorder %s140, 1
              %s145 = sphi %s127, %s127
              %s146 = sphi %s130, %s130
            $region65: #{reverse.1} parent=61 // loop_header_branch
              %143 = sbr.rel (%p141) target = $region69
            $region66: #{reverse.1} parent=61 // loop_body
              %v147 = vld [vmem:[%s145] sm:%s138]
              %148 = vst [vmem:[%s146] sm:%s138] %v147
            $region67: #{reverse.1} parent=61 // loop_footer
              %s144 = sadd.s32 1, %s140
            $region68: #{reverse.1} parent=61 // loop_footer_branch
              %139 = sbr.rel target = $region64
            $region69: #{reverse.1} parent=61 // loop_exit
              _
          $region62: #{reverse.1} parent=53 // pred_fallthru
            _
        $region54: #{reverse.1} parent=49 // pred_fallthru
          _
        %163 = vnop
      $region50: #{reverse.1} parent=5 // pred_fallthru
        _
      %p164 = scmp.le.s32.totalorder 2, %s6
      // Predicated region
      $region81: #{reverse.1} parent=5 // pred_check
        %p165 = pneg %p164
      $region82: #{reverse.1} parent=5 // pred_check_branch
        %167 = sbr.rel (%p165) target = $region84
      $region83: #{reverse.1} parent=5 // pred_region
        %s168 = ssub.s32 %s6, 2
        %s169 = sand.u32 %s12, 1
        %s170 = sand.u32 %s12, 1
        %s171 = scalar_lea.vmem [#allocation3], %s170
      $region84: #{reverse.1} parent=5 // pred_fallthru
        _
    $region6: #{reverse.1} parent=1 // loop_footer
      %s10 = sadd.s32 1, %s6
    $region7: #{reverse.1} parent=1 // loop_footer_branch
      %5 = sbr.rel target = $region3
    $region8: #{reverse.1} parent=1 // loop_exit
      _

</llo_original>
